<compile_context>
chip_gen: v7x
topology: tpu7x:2x2x1
jax: 0.10.0
libtpu: 0.0.40
codegen_flags: <defaults>
</compile_context>

<pallas_src>
import jax
import jax.numpy as jnp
from jax.experimental import pallas as pl
from jax.experimental.pallas import tpu as pltpu

LANE = 128          # vreg lane width  -> last-dim alignment
SUBLANE_BF16 = 16   # bf16 packs 16 rows per sublane group -> M-tile alignment


def _round_up(n, m):
    return ((n + m - 1) // m) * m


def _cdiv(a, b):
    return -(-a // b)


def _resident_spec(block_shape, index_map, single_buffer):
    """BlockSpec for a block whose index never changes: one buffer is enough."""
    if single_buffer and hasattr(pl, "Buffered"):
        try:
            return pl.BlockSpec(block_shape, index_map,
                                pipeline_mode=pl.Buffered(1))
        except TypeError:   # jax without the pipeline_mode kwarg
            pass
    return pl.BlockSpec(block_shape, index_map)


# ----------------------------------------------------------------------------
# Kernels
# ----------------------------------------------------------------------------
def _mlp_kernel_resident(x_ref, w1_ref, b1_ref, w2_ref, b2_ref, o_ref):
    # fc1: relu(x @ W1 + b1).  bf16 operands, f32 MXU accumulation.
    xb = x_ref[...].astype(jnp.bfloat16)
    h = jnp.dot(xb, w1_ref[...], preferred_element_type=jnp.float32)
    h = jnp.maximum(h + b1_ref[...], 0.0)            # (1, hid_p) bias broadcasts
    # fc2: h @ W2 + b2.
    y = jnp.dot(h.astype(jnp.bfloat16), w2_ref[...],
                preferred_element_type=jnp.float32)
    o_ref[...] = (y + b2_ref[...]).astype(o_ref.dtype)


def _mlp_kernel_ktiled(x_ref, w1_ref, b1_ref, w2_ref, b2_ref, o_ref, acc_ref):
    # Hidden-dim chunked: h_k = relu(x @ W1[:, kblk] + b1[kblk]);
    # acc += h_k @ W2[kblk, :].  ReLU is elementwise over hidden units, so
    # chunking the hidden reduction is exact.
    k = pl.program_id(1)

    @pl.when(k == 0)
    def _():
        acc_ref[...] = jnp.zeros_like(acc_ref)

    xb = x_ref[...].astype(jnp.bfloat16)
    h = jnp.dot(xb, w1_ref[...], preferred_element_type=jnp.float32)
    h = jnp.maximum(h + b1_ref[...], 0.0)
    acc_ref[...] += jnp.dot(h.astype(jnp.bfloat16), w2_ref[...],
                            preferred_element_type=jnp.float32)

    @pl.when(k == pl.num_programs(1) - 1)
    def _():
        o_ref[...] = (acc_ref[...] + b2_ref[...]).astype(o_ref.dtype)


# ----------------------------------------------------------------------------
# VMEM footprint estimators (drive variant/tile selection and vmem_limit_bytes)
# ----------------------------------------------------------------------------
def _resident_vmem_bytes(bm, in_p, hid_p, out_p, out_bytes):
    weights = (in_p * hid_p + hid_p * out_p) * 2 + (hid_p + out_p) * 4  # 1-buffered
    x_tiles = 2 * bm * in_p * 4             # f32 x tile, double-buffered
    o_tiles = 2 * bm * out_p * out_bytes    # output tile, double-buffered
    body = bm * in_p * 2 + bm * hid_p * (4 + 2) + bm * out_p * 4
    return weights + x_tiles + o_tiles + body


def _ktiled_vmem_bytes(bm, tk, in_p, out_p, out_bytes):
    w_tiles = 2 * ((in_p * tk + tk * out_p) * 2 + tk * 4)  # W1/b1/W2 chunks, 2-buffered
    b2_res = out_p * 4
    x_tiles = 2 * bm * in_p * 4
    o_tiles = 2 * bm * out_p * out_bytes
    acc = bm * out_p * 4
    body = bm * in_p * 2 + bm * tk * (4 + 2) + bm * out_p * 4
    return w_tiles + b2_res + x_tiles + o_tiles + acc + body


# ----------------------------------------------------------------------------
# Parameter prep: pad + cast ONCE at load time (not per forward call)
# ----------------------------------------------------------------------------
def prepare_params(w1, b1, w2, b2):
    """Pad dims up to multiples of 128 (lane-dense) and cast weights to bf16."""
    in_dim, hidden = w1.shape
    out_dim = w2.shape[1]
    in_p = _round_up(in_dim, LANE)
    hid_p = _round_up(hidden, LANE)
    out_p = _round_up(out_dim, LANE)
    return dict(
        w1=jnp.pad(w1, ((0, in_p - in_dim), (0, hid_p - hidden))).astype(jnp.bfloat16),
        b1=jnp.pad(b1, (0, hid_p - hidden)).reshape(1, hid_p).astype(jnp.float32),
        w2=jnp.pad(w2, ((0, hid_p - hidden), (0, out_p - out_dim))).astype(jnp.bfloat16),
        b2=jnp.pad(b2, (0, out_p - out_dim)).reshape(1, out_p).astype(jnp.float32),
        in_dim=in_dim, hidden=hidden, out_dim=out_dim,
        in_p=in_p, hid_p=hid_p, out_p=out_p,
    )


# ----------------------------------------------------------------------------
# Forward wrapper
# ----------------------------------------------------------------------------
def simple_mlp(x, params, *, block_m=None, block_k=None,
               vmem_budget_bytes=40 * 2**20, out_dtype=jnp.float32,
               force_ktiled=False):
    """relu(x @ W1 + b1) @ W2 + b2 using params from prepare_params().

    x: [B, in_dim] float32 (cast to bf16 inside the kernel; f32 accumulation).
    """
    B = x.shape[0]
    in_dim, out_dim = params["in_dim"], params["out_dim"]
    in_p, hid_p, out_p = params["in_p"], params["hid_p"], params["out_p"]
    out_bytes = jnp.dtype(out_dtype).itemsize

    # ---- pick batch tile & variant (resident weights vs K-tiled) -----------
    bm_cap = _round_up(B, SUBLANE_BF16)
    candidates = ([_round_up(block_m, SUBLANE_BF16)] if block_m
                  else [512, 256, 128])

    variant, bm, tk = None, None, None
    if not force_ktiled:
        for cand in candidates:
            bm_try = min(cand, bm_cap)
            if (_resident_vmem_bytes(bm_try, in_p, hid_p, out_p, out_bytes) * 1.1
                    <= vmem_budget_bytes):
                variant, bm = "resident", bm_try
                break

    if variant is None:
        # K-tiled fallback: v7x (64 MiB VMEM), v5e (16 MiB scoped default), or
        # MLP widths where W1+W2 cannot stay fully resident.
        tk = min(block_k or 512, hid_p)
        tk = max(LANE, (tk // LANE) * LANE)
        while hid_p % tk:           # tk must divide the padded hidden dim
            tk -= LANE
        for cand in candidates:
            bm_try = min(cand, bm_cap)
            if (_ktiled_vmem_bytes(bm_try, tk, in_p, out_p, out_bytes) * 1.1
                    <= vmem_budget_bytes):
                variant, bm = "ktiled", bm_try
                break
        if variant is None:         # last resort: smallest batch tile
            variant, bm = "ktiled", min(128, bm_cap)

    # Prefer >= 2 batch tiles so both TensorCores get work ("parallel" axis).
    n_bt = _cdiv(B, bm)
    if n_bt < 2 and B > 256:
        bm = _round_up(_cdiv(B, 2), SUBLANE_BF16)
        n_bt = _cdiv(B, bm)
    b_p = n_bt * bm

    # ---- pad x (kept f32; bf16 cast happens inside the kernel) -------------
    if x.shape != (b_p, in_p):
        # Zero padding is exact: padded K columns contribute 0 to the f32
        # accumulation; padded batch rows / output columns are sliced off.
        x = jnp.pad(x, ((0, b_p - B), (0, in_p - in_dim)))

    flops = 2 * b_p * (in_p * hid_p + hid_p * out_p)
    bytes_accessed = (x.size * 4 + (in_p * hid_p + hid_p * out_p) * 2
                      + (hid_p + out_p) * 4 + b_p * out_p * out_bytes)
    cost = pl.CostEstimate(flops=flops, bytes_accessed=bytes_accessed,
                           transcendentals=0)

    if variant == "resident":
        footprint = _resident_vmem_bytes(bm, in_p, hid_p, out_p, out_bytes)
    else:
        footprint = _ktiled_vmem_bytes(bm, tk, in_p, out_p, out_bytes)
    vmem_limit = int(min(max(footprint * 1.3, 8 * 2**20), 100 * 2**20))

    def _call(single_buffer_weights):
        if variant == "resident":
            grid = (n_bt,)
            in_specs = [
                # x tile marches with the grid (double-buffered DMA) ...
                pl.BlockSpec((bm, in_p), lambda i: (i, 0)),
                # ... weights & biases keep a constant block index -> resident
                # in VMEM across all grid steps, single-buffered.
                _resident_spec((in_p, hid_p), lambda i: (0, 0), single_buffer_weights),
                _resident_spec((1, hid_p), lambda i: (0, 0), single_buffer_weights),
                _resident_spec((hid_p, out_p), lambda i: (0, 0), single_buffer_weights),
                _resident_spec((1, out_p), lambda i: (0, 0), single_buffer_weights),
            ]
            out_specs = pl.BlockSpec((bm, out_p), lambda i: (i, 0))
            kernel = _mlp_kernel_resident
            scratch_shapes = ()
            dims = ("parallel",)
        else:
            grid = (n_bt, hid_p // tk)          # reduction (K) axis last
            in_specs = [
                pl.BlockSpec((bm, in_p), lambda i, k: (i, 0)),   # resident over k
                pl.BlockSpec((in_p, tk), lambda i, k: (0, k)),   # W1 column chunk
                pl.BlockSpec((1, tk), lambda i, k: (0, k)),      # b1 chunk
                pl.BlockSpec((tk, out_p), lambda i, k: (k, 0)),  # W2 row chunk
                _resident_spec((1, out_p), lambda i, k: (0, 0), single_buffer_weights),
            ]
            out_specs = pl.BlockSpec((bm, out_p), lambda i, k: (i, 0))
            kernel = _mlp_kernel_ktiled
            scratch_shapes = (pltpu.VMEM((bm, out_p), jnp.float32),)
            dims = ("parallel", "arbitrary")

        return pl.pallas_call(
            kernel,
            out_shape=jax.ShapeDtypeStruct((b_p, out_p), out_dtype),
            grid=grid,
            in_specs=in_specs,
            out_specs=out_specs,
            scratch_shapes=scratch_shapes,
            compiler_params=pltpu.CompilerParams(
                dimension_semantics=dims,
                vmem_limit_bytes=vmem_limit,
            ),
            cost_estimate=cost,
        )(x, params["w1"], params["b1"], params["w2"], params["b2"])

    try:
        out_padded = _call(True)
    except Exception:
        # Fallback for jax builds that reject pl.Buffered(1) at lowering time;
        # identical kernel, default (double) buffering on the resident blocks.
        out_padded = _call(False)

    return out_padded[:B, :out_dim]


# ----------------------------------------------------------------------------
# References
# ----------------------------------------------------------------------------
def reference_mlp_f32(x, w1, b1, w2, b2):
    h = jnp.maximum(x @ w1 + b1, 0.0)
    return h @ w2 + b2


def reference_mlp_bf16(x, w1, b1, w2, b2):
    # Same numerics contract as the kernel: bf16 operands, f32 accumulation.
    xb, w1b, w2b = (a.astype(jnp.bfloat16) for a in (x, w1, w2))
    h = jnp.maximum(jnp.dot(xb, w1b, preferred_element_type=jnp.float32) + b1, 0.0)
    return jnp.dot(h.astype(jnp.bfloat16), w2b,
                   preferred_element_type=jnp.float32) + b2


if __name__ == "__main__":
    key = jax.random.PRNGKey(0)
    (kw1, kb1, kw2, kb2, kx, kx2,
     kw1b, kb1b, kw2b, kb2b, kx3) = jax.random.split(key, 11)

    # --- SimpleMLP(in_dim=32, hidden=64, out_dim=16) -------------------------
    # PyTorch nn.Linear stores weight as [out, in]; here W = weight.T ([in, out]).
    in_dim, hidden, out_dim = 32, 64, 16
    w1 = jax.random.normal(kw1, (in_dim, hidden), jnp.float32) * 0.1
    b1 = jax.random.normal(kb1, (hidden,), jnp.float32) * 0.1
    w2 = jax.random.normal(kw2, (hidden, out_dim), jnp.float32) * 0.1
    b2 = jax.random.normal(kb2, (out_dim,), jnp.float32) * 0.1
    params = prepare_params(w1, b1, w2, b2)     # pad + bf16-cast ONCE

    # small batch (single grid step, resident-weights variant)
    B = 8
    x = jax.random.normal(kx, (B, in_dim), jnp.float32)
    out = jax.block_until_ready(simple_mlp(x, params))
    assert out.shape == (B, out_dim)
    assert jnp.allclose(out, reference_mlp_bf16(x, w1, b1, w2, b2),
                        atol=2e-3, rtol=2e-3), "mismatch vs bf16 reference"
    assert jnp.allclose(out, reference_mlp_f32(x, w1, b1, w2, b2),
                        atol=5e-2, rtol=5e-2), "mismatch vs f32 reference"

    # larger batch: tiled / pipelined grid with >= 2 parallel batch tiles
    B2 = 1024
    x2 = jax.random.normal(kx2, (B2, in_dim), jnp.float32)
    out2 = jax.block_until_ready(simple_mlp(x2, params))
    assert out2.shape == (B2, out_dim)
    assert jnp.allclose(out2, reference_mlp_bf16(x2, w1, b1, w2, b2),
                        atol=2e-3, rtol=2e-3), "mismatch vs bf16 reference (tiled)"

    # K-tiled (hidden-reduction accumulator) fallback path, forced small to verify
    hid_b = 256
    w1b = jax.random.normal(kw1b, (in_dim, hid_b), jnp.float32) * 0.1
    b1b = jax.random.normal(kb1b, (hid_b,), jnp.float32) * 0.1
    w2b = jax.random.normal(kw2b, (hid_b, out_dim), jnp.float32) * 0.1
    b2b = jax.random.normal(kb2b, (out_dim,), jnp.float32) * 0.1
    params_b = prepare_params(w1b, b1b, w2b, b2b)
    B3 = 64
    x3 = jax.random.normal(kx3, (B3, in_dim), jnp.float32)
    out3 = jax.block_until_ready(
        simple_mlp(x3, params_b, block_k=128, force_ktiled=True))
    assert out3.shape == (B3, out_dim)
    assert jnp.allclose(out3, reference_mlp_bf16(x3, w1b, b1b, w2b, b2b),
                        atol=2e-2, rtol=2e-2), "mismatch vs bf16 reference (K-tiled)"

    print("KERNEL_OK")
</pallas_src>

<mosaic_0001>
module attributes {stable_mosaic.version = 11 : i64} {
  func.func @_mlp_kernel_resident(%arg0: i32, %arg1: memref<16x128xf32, #tpu.memory_space<vmem>>, %arg2: memref<128x128xbf16, #tpu.memory_space<vmem>>, %arg3: memref<1x128xf32, #tpu.memory_space<vmem>>, %arg4: memref<128x128xbf16, #tpu.memory_space<vmem>>, %arg5: memref<1x128xf32, #tpu.memory_space<vmem>>, %arg6: memref<16x128xf32, #tpu.memory_space<vmem>>) attributes {dimension_semantics = [#tpu.dimension_semantics<parallel>], iteration_bounds = array<i64: 1>, scalar_prefetch = 0 : i64, scratch_operands = 0 : i64, tpu.core_type = #tpu.core_type<tc>, window_params = [{transform_indices = @transform_0, window_bounds = array<i64: 16, 128>}, {pipeline_mode = #tpu.pipeline_mode<synchronous>, transform_indices = @transform_1, window_bounds = array<i64: 128, 128>}, {pipeline_mode = #tpu.pipeline_mode<synchronous>, transform_indices = @transform_2, window_bounds = array<i64: 1, 128>}, {pipeline_mode = #tpu.pipeline_mode<synchronous>, transform_indices = @transform_3, window_bounds = array<i64: 128, 128>}, {pipeline_mode = #tpu.pipeline_mode<synchronous>, transform_indices = @transform_4, window_bounds = array<i64: 1, 128>}, {transform_indices = @transform_5, window_bounds = array<i64: 16, 128>}]} {
    %c0 = arith.constant 0 : index
    %c0_0 = arith.constant 0 : index
    %0 = vector.load %arg1[%c0, %c0_0] : memref<16x128xf32, #tpu.memory_space<vmem>>, vector<16x128xf32>
    %1 = arith.truncf %0 : vector<16x128xf32> to vector<16x128xbf16>
    %c0_1 = arith.constant 0 : index
    %c0_2 = arith.constant 0 : index
    %2 = vector.load %arg2[%c0_1, %c0_2] : memref<128x128xbf16, #tpu.memory_space<vmem>>, vector<128x128xbf16>
    %cst = arith.constant dense<0.000000e+00> : vector<16x128xf32>
    %3 = tpu.matmul %1, %2, %cst {dimension_numbers = #tpu.dot_dimension_numbers<[1], [0], [0], [1], [0, 0, 1, 1], [], []>} : vector<16x128xbf16>, vector<128x128xbf16>, vector<16x128xf32> -> vector<16x128xf32>
    %c0_3 = arith.constant 0 : index
    %c0_4 = arith.constant 0 : index
    %4 = vector.load %arg3[%c0_3, %c0_4] : memref<1x128xf32, #tpu.memory_space<vmem>>, vector<1x128xf32>
    %5 = vector.broadcast %4 : vector<1x128xf32> to vector<16x128xf32>
    %6 = arith.addf %3, %5 : vector<16x128xf32>
    %cst_5 = arith.constant 0.000000e+00 : f32
    %7 = vector.broadcast %cst_5 : f32 to vector<16x128xf32>
    %8 = arith.maximumf %6, %7 : vector<16x128xf32>
    %9 = arith.truncf %8 : vector<16x128xf32> to vector<16x128xbf16>
    %c0_6 = arith.constant 0 : index
    %c0_7 = arith.constant 0 : index
    %10 = vector.load %arg4[%c0_6, %c0_7] : memref<128x128xbf16, #tpu.memory_space<vmem>>, vector<128x128xbf16>
    %cst_8 = arith.constant dense<0.000000e+00> : vector<16x128xf32>
    %11 = tpu.matmul %9, %10, %cst_8 {dimension_numbers = #tpu.dot_dimension_numbers<[1], [0], [0], [1], [0, 0, 1, 1], [], []>} : vector<16x128xbf16>, vector<128x128xbf16>, vector<16x128xf32> -> vector<16x128xf32>
    %c0_9 = arith.constant 0 : index
    %c0_10 = arith.constant 0 : index
    %12 = vector.load %arg5[%c0_9, %c0_10] : memref<1x128xf32, #tpu.memory_space<vmem>>, vector<1x128xf32>
    %13 = vector.broadcast %12 : vector<1x128xf32> to vector<16x128xf32>
    %14 = arith.addf %11, %13 : vector<16x128xf32>
    %c0_11 = arith.constant 0 : index
    %c0_12 = arith.constant 0 : index
    %15 = vector.load %arg6[%c0_11, %c0_12] : memref<16x128xf32, #tpu.memory_space<vmem>>, vector<16x128xf32>
    tpu.vector_store %arg6[%c0_11, %c0_12], %14 {strides = array<i32>} : memref<16x128xf32, #tpu.memory_space<vmem>>, vector<16x128xf32>,
    return
  }
  func.func @transform_0(%arg0: i32) -> (i32, i32) {
    %c0_i32 = arith.constant 0 : i32
    %c0_i32_0 = arith.constant 0 : i32
    return %arg0, %c0_i32 : i32, i32
  }
  func.func @transform_1(%arg0: i32) -> (i32, i32) {
    %c0_i32 = arith.constant 0 : i32
    %c0_i32_0 = arith.constant 0 : i32
    %c0_i32_1 = arith.constant 0 : i32
    return %c0_i32, %c0_i32_0 : i32, i32
  }
  func.func @transform_2(%arg0: i32) -> (i32, i32) {
    %c0_i32 = arith.constant 0 : i32
    %c0_i32_0 = arith.constant 0 : i32
    %c0_i32_1 = arith.constant 0 : i32
    return %c0_i32, %c0_i32_0 : i32, i32
  }
  func.func @transform_3(%arg0: i32) -> (i32, i32) {
    %c0_i32 = arith.constant 0 : i32
    %c0_i32_0 = arith.constant 0 : i32
    %c0_i32_1 = arith.constant 0 : i32
    return %c0_i32, %c0_i32_0 : i32, i32
  }
  func.func @transform_4(%arg0: i32) -> (i32, i32) {
    %c0_i32 = arith.constant 0 : i32
    %c0_i32_0 = arith.constant 0 : i32
    %c0_i32_1 = arith.constant 0 : i32
    return %c0_i32, %c0_i32_0 : i32, i32
  }
  func.func @transform_5(%arg0: i32) -> (i32, i32) {
    %c0_i32 = arith.constant 0 : i32
    %c0_i32_0 = arith.constant 0 : i32
    return %arg0, %c0_i32 : i32, i32
  }
}

module attributes {stable_mosaic.version = 11 : i64} {
  func.func @_mlp_kernel_resident(%arg0: i32, %arg1: memref<16x128xf32, #tpu.memory_space<vmem>>, %arg2: memref<128x128xbf16, #tpu.memory_space<vmem>>, %arg3: memref<1x128xf32, #tpu.memory_space<vmem>>, %arg4: memref<128x128xbf16, #tpu.memory_space<vmem>>, %arg5: memref<1x128xf32, #tpu.memory_space<vmem>>, %arg6: memref<16x128xf32, #tpu.memory_space<vmem>>) attributes {dimension_semantics = [#tpu.dimension_semantics<parallel>], iteration_bounds = array<i64: 1>, scalar_prefetch = 0 : i64, scratch_operands = 0 : i64, tpu.core_type = #tpu.core_type<tc>, window_params = [{transform_indices = @transform_0, window_bounds = array<i64: 16, 128>}, {pipeline_mode = #tpu.pipeline_mode<synchronous>, transform_indices = @transform_1, window_bounds = array<i64: 128, 128>}, {pipeline_mode = #tpu.pipeline_mode<synchronous>, transform_indices = @transform_2, window_bounds = array<i64: 1, 128>}, {pipeline_mode = #tpu.pipeline_mode<synchronous>, transform_indices = @transform_3, window_bounds = array<i64: 128, 128>}, {pipeline_mode = #tpu.pipeline_mode<synchronous>, transform_indices = @transform_4, window_bounds = array<i64: 1, 128>}, {transform_indices = @transform_5, window_bounds = array<i64: 16, 128>}]} {
    %c0 = arith.constant 0 : index
    %c0_0 = arith.constant 0 : index
    %0 = vector.load %arg1[%c0, %c0_0] : memref<16x128xf32, #tpu.memory_space<vmem>>, vector<16x128xf32>
    %1 = arith.truncf %0 : vector<16x128xf32> to vector<16x128xbf16>
    %c0_1 = arith.constant 0 : index
    %c0_2 = arith.constant 0 : index
    %2 = vector.load %arg2[%c0_1, %c0_2] : memref<128x128xbf16, #tpu.memory_space<vmem>>, vector<128x128xbf16>
    %cst = arith.constant dense<0.000000e+00> : vector<16x128xf32>
    %3 = tpu.matmul %1, %2, %cst {dimension_numbers = #tpu.dot_dimension_numbers<[1], [0], [0], [1], [0, 0, 1, 1], [], []>} : vector<16x128xbf16>, vector<128x128xbf16>, vector<16x128xf32> -> vector<16x128xf32>
    %c0_3 = arith.constant 0 : index
    %c0_4 = arith.constant 0 : index
    %4 = vector.load %arg3[%c0_3, %c0_4] : memref<1x128xf32, #tpu.memory_space<vmem>>, vector<1x128xf32>
    %5 = vector.broadcast %4 : vector<1x128xf32> to vector<16x128xf32>
    %6 = arith.addf %3, %5 : vector<16x128xf32>
    %cst_5 = arith.constant 0.000000e+00 : f32
    %7 = vector.broadcast %cst_5 : f32 to vector<16x128xf32>
    %8 = arith.maximumf %6, %7 : vector<16x128xf32>
    %9 = arith.truncf %8 : vector<16x128xf32> to vector<16x128xbf16>
    %c0_6 = arith.constant 0 : index
    %c0_7 = arith.constant 0 : index
    %10 = vector.load %arg4[%c0_6, %c0_7] : memref<128x128xbf16, #tpu.memory_space<vmem>>, vector<128x128xbf16>
    %cst_8 = arith.constant dense<0.000000e+00> : vector<16x128xf32>
    %11 = tpu.matmul %9, %10, %cst_8 {dimension_numbers = #tpu.dot_dimension_numbers<[1], [0], [0], [1], [0, 0, 1, 1], [], []>} : vector<16x128xbf16>, vector<128x128xbf16>, vector<16x128xf32> -> vector<16x128xf32>
    %c0_9 = arith.constant 0 : index
    %c0_10 = arith.constant 0 : index
    %12 = vector.load %arg5[%c0_9, %c0_10] : memref<1x128xf32, #tpu.memory_space<vmem>>, vector<1x128xf32>
    %13 = vector.broadcast %12 : vector<1x128xf32> to vector<16x128xf32>
    %14 = arith.addf %11, %13 : vector<16x128xf32>
    %c0_11 = arith.constant 0 : index
    %c0_12 = arith.constant 0 : index
    %15 = vector.load %arg6[%c0_11, %c0_12] : memref<16x128xf32, #tpu.memory_space<vmem>>, vector<16x128xf32>
    tpu.vector_store %arg6[%c0_11, %c0_12], %14 {strides = array<i32>} : memref<16x128xf32, #tpu.memory_space<vmem>>, vector<16x128xf32>,
    return
  }
  func.func @transform_0(%arg0: i32) -> (i32, i32) {
    %c0_i32 = arith.constant 0 : i32
    %c0_i32_0 = arith.constant 0 : i32
    return %arg0, %c0_i32 : i32, i32
  }
  func.func @transform_1(%arg0: i32) -> (i32, i32) {
    %c0_i32 = arith.constant 0 : i32
    %c0_i32_0 = arith.constant 0 : i32
    %c0_i32_1 = arith.constant 0 : i32
    return %c0_i32, %c0_i32_0 : i32, i32
  }
  func.func @transform_2(%arg0: i32) -> (i32, i32) {
    %c0_i32 = arith.constant 0 : i32
    %c0_i32_0 = arith.constant 0 : i32
    %c0_i32_1 = arith.constant 0 : i32
    return %c0_i32, %c0_i32_0 : i32, i32
  }
  func.func @transform_3(%arg0: i32) -> (i32, i32) {
    %c0_i32 = arith.constant 0 : i32
    %c0_i32_0 = arith.constant 0 : i32
    %c0_i32_1 = arith.constant 0 : i32
    return %c0_i32, %c0_i32_0 : i32, i32
  }
  func.func @transform_4(%arg0: i32) -> (i32, i32) {
    %c0_i32 = arith.constant 0 : i32
    %c0_i32_0 = arith.constant 0 : i32
    %c0_i32_1 = arith.constant 0 : i32
    return %c0_i32, %c0_i32_0 : i32, i32
  }
  func.func @transform_5(%arg0: i32) -> (i32, i32) {
    %c0_i32 = arith.constant 0 : i32
    %c0_i32_0 = arith.constant 0 : i32
    return %arg0, %c0_i32 : i32, i32
  }
}

</mosaic_0001>

<llo_original>
// kernel: tpu_custom_call.1
$region0: #{tpu_custom_call.1}
  #allocation0 [shape = 'u32[]', space=smem, size = 0x4, offset = 0x4, fixed_abs, tag = 'smem constant byte address 0x4 - core index']
  #allocation1 [shape = 'u32[144,128]{1,0:T(1,128)}', space=vmem, size = 0x12000, scoped, tag = 'internal scratch']
  %s0 = inlined_call_operand.hbm [shape: f32[16,128], index: 0, kind: input, shape index: {}]
  %s1 = inlined_call_operand.hbm [shape: bf16[128,128], index: 1, kind: input, shape index: {}]
  %s2 = inlined_call_operand.vmem [shape: f32[1,128], index: 2, kind: input, shape index: {}]
  %s3 = inlined_call_operand.hbm [shape: bf16[128,128], index: 3, kind: input, shape index: {}]
  %s4 = inlined_call_operand.vmem [shape: f32[1,128], index: 4, kind: input, shape index: {}]
  %s5 = inlined_call_operand.hbm [shape: f32[16,128], index: 5, kind: output, shape index: {}]
  %s6 = sld [smem:[#allocation0]]
  $region42: #{tpu_custom_call.1} parent=0
    _
  %s8 = ssub.s32 1, %s6
  %s9 = scalar_select 0, %s8, %s6
  $region1: #{tpu_custom_call.1} parent=0
    #allocation2 [shape = 'u8[8192]{0}', space=vmem, size = 0x2000, scoped, tag = 'input window, operand 0, single buffered']
    #allocation3 [shape = 's32[1]{0}', space=sflag, size = 0x4, scoped, tag = 'scoped memory for tpu_custom_call.1']
    #allocation4 [shape = 's32[1]{0}', space=sflag, size = 0x4, scoped, tag = 'scoped memory for tpu_custom_call.1']
    #allocation5 [shape = 'u8[32768]{0}', space=vmem, size = 0x8000, scoped, tag = 'input window, operand 1, single buffered']
    #allocation6 [shape = 's32[1]{0}', space=sflag, size = 0x4, scoped, tag = 'scoped memory for tpu_custom_call.1']
    #allocation7 [shape = 'u8[32768]{0}', space=vmem, size = 0x8000, scoped, tag = 'input window, operand 3, single buffered']
    #allocation8 [shape = 'u8[8192]{0}', space=vmem, size = 0x2000, scoped, tag = 'output window, operand 0, single buffered']
    %10 = vsyncpa [#allocation3], 0
    %11 = vsyncpa [#allocation6], 0
    %12 = vsyncpa [#allocation4], 0
    // Predicated region
    $region2: #{tpu_custom_call.1} parent=1 // pred_check
      _
    $region3: #{tpu_custom_call.1} parent=1 // pred_check_branch
      %14 = sbr.rel (0) target = $region5
    $region4: #{tpu_custom_call.1} parent=1 // pred_region
      %s16 = ssub.s32 256, 256
      %17 = vsyncadd [#allocation3], %s16
      %s18 = sshll.u32 [#allocation2], 4
      %s19 = int_to_ptr.vmem [resolvable:$true] %s18
      %24 = dma.hbm_to_vmem [thread:$0]  %s0, 256, %s19, [#allocation3], 128, 128, 8
    $region5: #{tpu_custom_call.1} parent=1 // pred_fallthru
      _
    // Predicated region
    $region6: #{tpu_custom_call.1} parent=1 // pred_check
      _
    $region7: #{tpu_custom_call.1} parent=1 // pred_check_branch
      %26 = sbr.rel (0) target = $region9
    $region8: #{tpu_custom_call.1} parent=1 // pred_region
      %s28 = ssub.s32 1024, 1024
      %29 = vsyncadd [#allocation6], %s28
      %s30 = sshll.u32 [#allocation5], 4
      %s31 = int_to_ptr.vmem [resolvable:$true] %s30
      %36 = dma.hbm_to_vmem [thread:$0]  %s1, 1024, %s31, [#allocation6], 64, 64, 4
    $region9: #{tpu_custom_call.1} parent=1 // pred_fallthru
      _
    // Predicated region
    $region10: #{tpu_custom_call.1} parent=1 // pred_check
      _
    $region11: #{tpu_custom_call.1} parent=1 // pred_check_branch
      %38 = sbr.rel (0) target = $region13
    $region12: #{tpu_custom_call.1} parent=1 // pred_region
      _
    $region13: #{tpu_custom_call.1} parent=1 // pred_fallthru
      _
    // Predicated region
    $region14: #{tpu_custom_call.1} parent=1 // pred_check
      _
    $region15: #{tpu_custom_call.1} parent=1 // pred_check_branch
      %40 = sbr.rel (0) target = $region17
    $region16: #{tpu_custom_call.1} parent=1 // pred_region
      %s42 = ssub.s32 1024, 1024
      %43 = vsyncadd [#allocation6], %s42
      %s44 = sshll.u32 [#allocation7], 4
      %s45 = int_to_ptr.vmem [resolvable:$true] %s44
      %50 = dma.hbm_to_vmem [thread:$0]  %s3, 1024, %s45, [#allocation6], 64, 64, 4
    $region17: #{tpu_custom_call.1} parent=1 // pred_fallthru
      _
    // Predicated region
    $region18: #{tpu_custom_call.1} parent=1 // pred_check
      _
    $region19: #{tpu_custom_call.1} parent=1 // pred_check_branch
      %52 = sbr.rel (0) target = $region21
    $region20: #{tpu_custom_call.1} parent=1 // pred_region
      _
    $region21: #{tpu_custom_call.1} parent=1 // pred_fallthru
      _
    // Predicated region
    $region22: #{tpu_custom_call.1} parent=1 // pred_check
      _
    $region23: #{tpu_custom_call.1} parent=1 // pred_check_branch
      %54 = sbr.rel (0) target = $region25
    $region24: #{tpu_custom_call.1} parent=1 // pred_region
      %55 = dma.done [#allocation3], 256
    $region25: #{tpu_custom_call.1} parent=1 // pred_fallthru
      _
    // Predicated region
    $region26: #{tpu_custom_call.1} parent=1 // pred_check
      _
    $region27: #{tpu_custom_call.1} parent=1 // pred_check_branch
      %57 = sbr.rel (0) target = $region29
    $region28: #{tpu_custom_call.1} parent=1 // pred_region
      %58 = dma.done [#allocation6], 1024
    $region29: #{tpu_custom_call.1} parent=1 // pred_fallthru
      _
    // Predicated region
    $region30: #{tpu_custom_call.1} parent=1 // pred_check
      _
    $region31: #{tpu_custom_call.1} parent=1 // pred_check_branch
      %60 = sbr.rel (0) target = $region33
    $region32: #{tpu_custom_call.1} parent=1 // pred_region
      %61 = dma.done [#allocation6], 1024
    $region33: #{tpu_custom_call.1} parent=1 // pred_fallthru
      _
    %v63 = vld [vmem:[#allocation2] sm:$0xff]
    %v64 = vld [vmem:[#allocation2 + $0x8] sm:$0xff]
    %v65 = vpack.c.bf16 %v64, %v63
    %v66 = vld [vmem:[#allocation5] sm:$0xf]
    %v67 = vld [vmem:[#allocation5 + $0x4] sm:$0xf]
    %v68 = vld [vmem:[#allocation5 + $0x8] sm:$0xf]
    %v69 = vld [vmem:[#allocation5 + $0xc] sm:$0xf]
    %v70 = vld [vmem:[#allocation5 + $0x10] sm:$0xf]
    %v71 = vld [vmem:[#allocation5 + $0x14] sm:$0xf]
    %v72 = vld [vmem:[#allocation5 + $0x18] sm:$0xf]
    %v73 = vld [vmem:[#allocation5 + $0x1c] sm:$0xf]
    %v74 = vld [vmem:[#allocation5 + $0x20] sm:$0xf]
    %v75 = vld [vmem:[#allocation5 + $0x24] sm:$0xf]
    %v76 = vld [vmem:[#allocation5 + $0x28] sm:$0xf]
    %v77 = vld [vmem:[#allocation5 + $0x2c] sm:$0xf]
    %v78 = vld [vmem:[#allocation5 + $0x30] sm:$0xf]
    %v79 = vld [vmem:[#allocation5 + $0x34] sm:$0xf]
    %v80 = vld [vmem:[#allocation5 + $0x38] sm:$0xf]
    %v81 = vld [vmem:[#allocation5 + $0x3c] sm:$0xf]
    %v82 = vld [vmem:[%s2] sm:$0x1]
    %v84 = vlaneseq
    %v85 = vshrl.u32 %v84, 7
    %v86 = vsub.s32 0, %v85
    %v87 = vrot.slane %v82, %v86
    %v105 = vunpack.c.l.b16 %v66
    %v106 = vunpack.c.l.b16 %v67
    %v107 = vunpack.c.l.b16 %v68
    %v108 = vunpack.c.l.b16 %v69
    %v109 = vunpack.c.l.b16 %v70
    %v110 = vunpack.c.l.b16 %v71
    %v111 = vunpack.c.l.b16 %v72
    %v112 = vunpack.c.l.b16 %v73
    %v113 = vunpack.c.l.b16 %v74
    %v114 = vunpack.c.l.b16 %v75
    %v115 = vunpack.c.l.b16 %v76
    %v116 = vunpack.c.l.b16 %v77
    %v117 = vunpack.c.l.b16 %v78
    %v118 = vunpack.c.l.b16 %v79
    %v119 = vunpack.c.l.b16 %v80
    %v120 = vunpack.c.l.b16 %v81
    %v121 = vpack.c.b16 %v106, %v105
    %v122 = vpack.c.b16 %v108, %v107
    %v123 = vpack.c.b16 %v110, %v109
    %v124 = vpack.c.b16 %v112, %v111
    %v125 = vpack.c.b16 %v114, %v113
    %v126 = vpack.c.b16 %v116, %v115
    %v127 = vpack.c.b16 %v118, %v117
    %v128 = vpack.c.b16 %v120, %v119
    %137 = vmatprep.subr.bf16.mxu0 0
    %138 = vmatpush1.bf16.msra.mxu0 %v121
    %139 = vmatprep.subr.bf16.mxu0 0
    %140 = vmatpush1.bf16.msra.mxu0 %v122
    %141 = vmatprep.subr.bf16.mxu0 0
    %142 = vmatpush1.bf16.msra.mxu0 %v123
    %143 = vmatprep.subr.bf16.mxu0 0
    %144 = vmatpush1.bf16.msra.mxu0 %v124
    %145 = vmatprep.subr.bf16.mxu0 0
    %146 = vmatpush1.bf16.msra.mxu0 %v125
    %147 = vmatprep.subr.bf16.mxu0 0
    %148 = vmatpush1.bf16.msra.mxu0 %v126
    %149 = vmatprep.subr.bf16.mxu0 0
    %150 = vmatpush1.bf16.msra.mxu0 %v127
    %151 = vmatprep.subr.bf16.mxu0 0
    %152 = vmatpush1.bf16.msra.mxu0 %v128
    %153 = vmatprep.subr.bf16.mxu0 0
    %154 = vmatpush1.bf16.msra.mxu0 0
    %155 = vmatprep.subr.bf16.mxu0 0
    %156 = vmatpush1.bf16.msra.mxu0 0
    %157 = vmatprep.subr.bf16.mxu0 0
    %158 = vmatpush1.bf16.msra.mxu0 0
    %159 = vmatprep.subr.bf16.mxu0 0
    %160 = vmatpush1.bf16.msra.mxu0 0
    %161 = vmatprep.subr.bf16.mxu0 0
    %162 = vmatpush1.bf16.msra.mxu0 0
    %163 = vmatprep.subr.bf16.mxu0 0
    %164 = vmatpush1.bf16.msra.mxu0 0
    %165 = vmatprep.subr.bf16.mxu0 0
    %166 = vmatpush1.bf16.msra.mxu0 0
    %167 = vmatprep.subr.bf16.mxu0 0
    %168 = vmatpush1.bf16.msra.mxu0 0
    %169 = vmatprep.mubr.bf16.mxu0 0
    %170 = vmatmul.mubr.bf16.gmra.mrb[0].mxu0 %v65
    %v171 = vpop.f32.mrb[0].mxu0
    %v172 = vadd.f32 %v87, %v171
    %v173 = vpop.f32.mrb[0].mxu0
    %v174 = vpop.f32.mrb[0].mxu0
    %v175 = vadd.f32 %v87, %v174
    %v176 = vpop.f32.mrb[0].mxu0
    %177 = vdwg.mxu0
    %v178 = vmax.f32 %v172, 0.0
    %v179 = vmax.f32 %v175, 0.0
    %v180 = vpack.c.bf16 %v179, %v178
    %v181 = vld [vmem:[#allocation7] sm:$0xf]
    %v182 = vld [vmem:[#allocation7 + $0x4] sm:$0xf]
    %v183 = vld [vmem:[#allocation7 + $0x8] sm:$0xf]
    %v184 = vld [vmem:[#allocation7 + $0xc] sm:$0xf]
    %v185 = vld [vmem:[#allocation7 + $0x10] sm:$0xf]
    %v186 = vld [vmem:[#allocation7 + $0x14] sm:$0xf]
    %v187 = vld [vmem:[#allocation7 + $0x18] sm:$0xf]
    %v188 = vld [vmem:[#allocation7 + $0x1c] sm:$0xf]
    %v189 = vld [vmem:[#allocation7 + $0x20] sm:$0xf]
    %v190 = vld [vmem:[#allocation7 + $0x24] sm:$0xf]
    %v191 = vld [vmem:[#allocation7 + $0x28] sm:$0xf]
    %v192 = vld [vmem:[#allocation7 + $0x2c] sm:$0xf]
    %v193 = vld [vmem:[#allocation7 + $0x30] sm:$0xf]
    %v194 = vld [vmem:[#allocation7 + $0x34] sm:$0xf]
    %v195 = vld [vmem:[#allocation7 + $0x38] sm:$0xf]
    %v196 = vld [vmem:[#allocation7 + $0x3c] sm:$0xf]
    %v197 = vld [vmem:[%s4] sm:$0x1]
    %v199 = vlaneseq
    %v200 = vshrl.u32 %v199, 7
    %v201 = vsub.s32 0, %v200
    %v202 = vrot.slane %v197, %v201
    %v220 = vunpack.c.l.b16 %v181
    %v221 = vunpack.c.l.b16 %v182
    %v222 = vunpack.c.l.b16 %v183
    %v223 = vunpack.c.l.b16 %v184
    %v224 = vunpack.c.l.b16 %v185
    %v225 = vunpack.c.l.b16 %v186
    %v226 = vunpack.c.l.b16 %v187
    %v227 = vunpack.c.l.b16 %v188
    %v228 = vunpack.c.l.b16 %v189
    %v229 = vunpack.c.l.b16 %v190
    %v230 = vunpack.c.l.b16 %v191
    %v231 = vunpack.c.l.b16 %v192
    %v232 = vunpack.c.l.b16 %v193
    %v233 = vunpack.c.l.b16 %v194
    %v234 = vunpack.c.l.b16 %v195
    %v235 = vunpack.c.l.b16 %v196
    %v236 = vpack.c.b16 %v221, %v220
    %v237 = vpack.c.b16 %v223, %v222
    %v238 = vpack.c.b16 %v225, %v224
    %v239 = vpack.c.b16 %v227, %v226
    %v240 = vpack.c.b16 %v229, %v228
    %v241 = vpack.c.b16 %v231, %v230
    %v242 = vpack.c.b16 %v233, %v232
    %v243 = vpack.c.b16 %v235, %v234
    %252 = vmatprep.subr.bf16.mxu0 0
    %253 = vmatpush1.bf16.msra.mxu0 %v236
    %254 = vmatprep.subr.bf16.mxu0 0
    %255 = vmatpush1.bf16.msra.mxu0 %v237
    %256 = vmatprep.subr.bf16.mxu0 0
    %257 = vmatpush1.bf16.msra.mxu0 %v238
    %258 = vmatprep.subr.bf16.mxu0 0
    %259 = vmatpush1.bf16.msra.mxu0 %v239
    %260 = vmatprep.subr.bf16.mxu0 0
    %261 = vmatpush1.bf16.msra.mxu0 %v240
    %262 = vmatprep.subr.bf16.mxu0 0
    %263 = vmatpush1.bf16.msra.mxu0 %v241
    %264 = vmatprep.subr.bf16.mxu0 0
    %265 = vmatpush1.bf16.msra.mxu0 %v242
    %266 = vmatprep.subr.bf16.mxu0 0
    %267 = vmatpush1.bf16.msra.mxu0 %v243
    %268 = vmatprep.subr.bf16.mxu0 0
    %269 = vmatpush1.bf16.msra.mxu0 0
    %270 = vmatprep.subr.bf16.mxu0 0
    %271 = vmatpush1.bf16.msra.mxu0 0
    %272 = vmatprep.subr.bf16.mxu0 0
    %273 = vmatpush1.bf16.msra.mxu0 0
    %274 = vmatprep.subr.bf16.mxu0 0
    %275 = vmatpush1.bf16.msra.mxu0 0
    %276 = vmatprep.subr.bf16.mxu0 0
    %277 = vmatpush1.bf16.msra.mxu0 0
    %278 = vmatprep.subr.bf16.mxu0 0
    %279 = vmatpush1.bf16.msra.mxu0 0
    %280 = vmatprep.subr.bf16.mxu0 0
    %281 = vmatpush1.bf16.msra.mxu0 0
    %282 = vmatprep.subr.bf16.mxu0 0
    %283 = vmatpush1.bf16.msra.mxu0 0
    %284 = vmatprep.mubr.bf16.mxu0 0
    %285 = vmatmul.mubr.bf16.gmra.mrb[0].mxu0 %v180
    %v286 = vpop.f32.mrb[0].mxu0
    %v287 = vadd.f32 %v202, %v286
    %v288 = vpop.f32.mrb[0].mxu0
    %v289 = vpop.f32.mrb[0].mxu0
    %v290 = vadd.f32 %v202, %v289
    %v291 = vpop.f32.mrb[0].mxu0
    %292 = vdwg.mxu0
    %293 = vst [vmem:[#allocation8] sm:$0xff] %v287
    %294 = vst [vmem:[#allocation8 + $0x8] sm:$0xff] %v290
    // Predicated region
    $region34: #{tpu_custom_call.1} parent=1 // pred_check
      _
    $region35: #{tpu_custom_call.1} parent=1 // pred_check_branch
      %296 = sbr.rel (0) target = $region37
    $region36: #{tpu_custom_call.1} parent=1 // pred_region
      %s298 = ssub.s32 256, 256
      %299 = vsyncadd [#allocation4], %s298
      %s300 = sshll.u32 [#allocation8], 4
      %s301 = int_to_ptr.vmem [resolvable:$true] %s300
      %306 = dma.vmem_to_hbm [thread:$0]  %s301, 256, %s5, [#allocation4], 128, 128, 8
    $region37: #{tpu_custom_call.1} parent=1 // pred_fallthru
      _
    // Predicated region
    $region38: #{tpu_custom_call.1} parent=1 // pred_check
      _
    $region39: #{tpu_custom_call.1} parent=1 // pred_check_branch
      %308 = sbr.rel (0) target = $region41
    $region40: #{tpu_custom_call.1} parent=1 // pred_region
      %309 = dma.done [#allocation4], 256
    $region41: #{tpu_custom_call.1} parent=1 // pred_fallthru
      _
    %310 = vsyncpa [#allocation3], 1
    %311 = vsyncpa [#allocation6], 1
    %312 = vsyncpa [#allocation4], 1

// kernel: tpu_custom_call.1
$region0: #{tpu_custom_call.1}
  #allocation0 [shape = 'u32[]', space=smem, size = 0x4, offset = 0x4, fixed_abs, tag = 'smem constant byte address 0x4 - core index']
  #allocation1 [shape = 'u32[144,128]{1,0:T(1,128)}', space=vmem, size = 0x12000, scoped, tag = 'internal scratch']
  %s0 = inlined_call_operand.hbm [shape: f32[16,128], index: 0, kind: input, shape index: {}]
  %s1 = inlined_call_operand.hbm [shape: bf16[128,128], index: 1, kind: input, shape index: {}]
  %s2 = inlined_call_operand.vmem [shape: f32[1,128], index: 2, kind: input, shape index: {}]
  %s3 = inlined_call_operand.hbm [shape: bf16[128,128], index: 3, kind: input, shape index: {}]
  %s4 = inlined_call_operand.vmem [shape: f32[1,128], index: 4, kind: input, shape index: {}]
  %s5 = inlined_call_operand.hbm [shape: f32[16,128], index: 5, kind: output, shape index: {}]
  %s6 = sld [smem:[#allocation0]]
  $region42: #{tpu_custom_call.1} parent=0
    _
  %s8 = ssub.s32 1, %s6
  %s9 = scalar_select 0, %s8, %s6
  $region1: #{tpu_custom_call.1} parent=0
    #allocation2 [shape = 'u8[8192]{0}', space=vmem, size = 0x2000, scoped, tag = 'input window, operand 0, single buffered']
    #allocation3 [shape = 's32[1]{0}', space=sflag, size = 0x4, scoped, tag = 'scoped memory for tpu_custom_call.1']
    #allocation4 [shape = 's32[1]{0}', space=sflag, size = 0x4, scoped, tag = 'scoped memory for tpu_custom_call.1']
    #allocation5 [shape = 'u8[32768]{0}', space=vmem, size = 0x8000, scoped, tag = 'input window, operand 1, single buffered']
    #allocation6 [shape = 's32[1]{0}', space=sflag, size = 0x4, scoped, tag = 'scoped memory for tpu_custom_call.1']
    #allocation7 [shape = 'u8[32768]{0}', space=vmem, size = 0x8000, scoped, tag = 'input window, operand 3, single buffered']
    #allocation8 [shape = 'u8[8192]{0}', space=vmem, size = 0x2000, scoped, tag = 'output window, operand 0, single buffered']
    %10 = vsyncpa [#allocation3], 0
    %11 = vsyncpa [#allocation6], 0
    %12 = vsyncpa [#allocation4], 0
    // Predicated region
    $region2: #{tpu_custom_call.1} parent=1 // pred_check
      _
    $region3: #{tpu_custom_call.1} parent=1 // pred_check_branch
      %14 = sbr.rel (0) target = $region5
    $region4: #{tpu_custom_call.1} parent=1 // pred_region
      %s16 = ssub.s32 256, 256
      %17 = vsyncadd [#allocation3], %s16
      %s18 = sshll.u32 [#allocation2], 4
      %s19 = int_to_ptr.vmem [resolvable:$true] %s18
      %24 = dma.hbm_to_vmem [thread:$0]  %s0, 256, %s19, [#allocation3], 128, 128, 8
    $region5: #{tpu_custom_call.1} parent=1 // pred_fallthru
      _
    // Predicated region
    $region6: #{tpu_custom_call.1} parent=1 // pred_check
      _
    $region7: #{tpu_custom_call.1} parent=1 // pred_check_branch
      %26 = sbr.rel (0) target = $region9
    $region8: #{tpu_custom_call.1} parent=1 // pred_region
      %s28 = ssub.s32 1024, 1024
      %29 = vsyncadd [#allocation6], %s28
      %s30 = sshll.u32 [#allocation5], 4
      %s31 = int_to_ptr.vmem [resolvable:$true] %s30
      %36 = dma.hbm_to_vmem [thread:$0]  %s1, 1024, %s31, [#allocation6], 64, 64, 4
    $region9: #{tpu_custom_call.1} parent=1 // pred_fallthru
      _
    // Predicated region
    $region10: #{tpu_custom_call.1} parent=1 // pred_check
      _
    $region11: #{tpu_custom_call.1} parent=1 // pred_check_branch
      %38 = sbr.rel (0) target = $region13
    $region12: #{tpu_custom_call.1} parent=1 // pred_region
      _
    $region13: #{tpu_custom_call.1} parent=1 // pred_fallthru
      _
    // Predicated region
    $region14: #{tpu_custom_call.1} parent=1 // pred_check
      _
    $region15: #{tpu_custom_call.1} parent=1 // pred_check_branch
      %40 = sbr.rel (0) target = $region17
    $region16: #{tpu_custom_call.1} parent=1 // pred_region
      %s42 = ssub.s32 1024, 1024
      %43 = vsyncadd [#allocation6], %s42
      %s44 = sshll.u32 [#allocation7], 4
      %s45 = int_to_ptr.vmem [resolvable:$true] %s44
      %50 = dma.hbm_to_vmem [thread:$0]  %s3, 1024, %s45, [#allocation6], 64, 64, 4
    $region17: #{tpu_custom_call.1} parent=1 // pred_fallthru
      _
    // Predicated region
    $region18: #{tpu_custom_call.1} parent=1 // pred_check
      _
    $region19: #{tpu_custom_call.1} parent=1 // pred_check_branch
      %52 = sbr.rel (0) target = $region21
    $region20: #{tpu_custom_call.1} parent=1 // pred_region
      _
    $region21: #{tpu_custom_call.1} parent=1 // pred_fallthru
      _
    // Predicated region
    $region22: #{tpu_custom_call.1} parent=1 // pred_check
      _
    $region23: #{tpu_custom_call.1} parent=1 // pred_check_branch
      %54 = sbr.rel (0) target = $region25
    $region24: #{tpu_custom_call.1} parent=1 // pred_region
      %55 = dma.done [#allocation3], 256
    $region25: #{tpu_custom_call.1} parent=1 // pred_fallthru
      _
    // Predicated region
    $region26: #{tpu_custom_call.1} parent=1 // pred_check
      _
    $region27: #{tpu_custom_call.1} parent=1 // pred_check_branch
      %57 = sbr.rel (0) target = $region29
    $region28: #{tpu_custom_call.1} parent=1 // pred_region
      %58 = dma.done [#allocation6], 1024
    $region29: #{tpu_custom_call.1} parent=1 // pred_fallthru
      _
    // Predicated region
    $region30: #{tpu_custom_call.1} parent=1 // pred_check
      _
    $region31: #{tpu_custom_call.1} parent=1 // pred_check_branch
      %60 = sbr.rel (0) target = $region33
    $region32: #{tpu_custom_call.1} parent=1 // pred_region
      %61 = dma.done [#allocation6], 1024
    $region33: #{tpu_custom_call.1} parent=1 // pred_fallthru
      _
    %v63 = vld [vmem:[#allocation2] sm:$0xff]
    %v64 = vld [vmem:[#allocation2 + $0x8] sm:$0xff]
    %v65 = vpack.c.bf16 %v64, %v63
    %v66 = vld [vmem:[#allocation5] sm:$0xf]
    %v67 = vld [vmem:[#allocation5 + $0x4] sm:$0xf]
    %v68 = vld [vmem:[#allocation5 + $0x8] sm:$0xf]
    %v69 = vld [vmem:[#allocation5 + $0xc] sm:$0xf]
    %v70 = vld [vmem:[#allocation5 + $0x10] sm:$0xf]
    %v71 = vld [vmem:[#allocation5 + $0x14] sm:$0xf]
    %v72 = vld [vmem:[#allocation5 + $0x18] sm:$0xf]
    %v73 = vld [vmem:[#allocation5 + $0x1c] sm:$0xf]
    %v74 = vld [vmem:[#allocation5 + $0x20] sm:$0xf]
    %v75 = vld [vmem:[#allocation5 + $0x24] sm:$0xf]
    %v76 = vld [vmem:[#allocation5 + $0x28] sm:$0xf]
    %v77 = vld [vmem:[#allocation5 + $0x2c] sm:$0xf]
    %v78 = vld [vmem:[#allocation5 + $0x30] sm:$0xf]
    %v79 = vld [vmem:[#allocation5 + $0x34] sm:$0xf]
    %v80 = vld [vmem:[#allocation5 + $0x38] sm:$0xf]
    %v81 = vld [vmem:[#allocation5 + $0x3c] sm:$0xf]
    %v82 = vld [vmem:[%s2] sm:$0x1]
    %v84 = vlaneseq
    %v85 = vshrl.u32 %v84, 7
    %v86 = vsub.s32 0, %v85
    %v87 = vrot.slane %v82, %v86
    %v105 = vunpack.c.l.b16 %v66
    %v106 = vunpack.c.l.b16 %v67
    %v107 = vunpack.c.l.b16 %v68
    %v108 = vunpack.c.l.b16 %v69
    %v109 = vunpack.c.l.b16 %v70
    %v110 = vunpack.c.l.b16 %v71
    %v111 = vunpack.c.l.b16 %v72
    %v112 = vunpack.c.l.b16 %v73
    %v113 = vunpack.c.l.b16 %v74
    %v114 = vunpack.c.l.b16 %v75
    %v115 = vunpack.c.l.b16 %v76
    %v116 = vunpack.c.l.b16 %v77
    %v117 = vunpack.c.l.b16 %v78
    %v118 = vunpack.c.l.b16 %v79
    %v119 = vunpack.c.l.b16 %v80
    %v120 = vunpack.c.l.b16 %v81
    %v121 = vpack.c.b16 %v106, %v105
    %v122 = vpack.c.b16 %v108, %v107
    %v123 = vpack.c.b16 %v110, %v109
    %v124 = vpack.c.b16 %v112, %v111
    %v125 = vpack.c.b16 %v114, %v113
    %v126 = vpack.c.b16 %v116, %v115
    %v127 = vpack.c.b16 %v118, %v117
    %v128 = vpack.c.b16 %v120, %v119
    %137 = vmatprep.subr.bf16.mxu0 0
    %138 = vmatpush1.bf16.msra.mxu0 %v121
    %139 = vmatprep.subr.bf16.mxu0 0
    %140 = vmatpush1.bf16.msra.mxu0 %v122
    %141 = vmatprep.subr.bf16.mxu0 0
    %142 = vmatpush1.bf16.msra.mxu0 %v123
    %143 = vmatprep.subr.bf16.mxu0 0
    %144 = vmatpush1.bf16.msra.mxu0 %v124
    %145 = vmatprep.subr.bf16.mxu0 0
    %146 = vmatpush1.bf16.msra.mxu0 %v125
    %147 = vmatprep.subr.bf16.mxu0 0
    %148 = vmatpush1.bf16.msra.mxu0 %v126
    %149 = vmatprep.subr.bf16.mxu0 0
    %150 = vmatpush1.bf16.msra.mxu0 %v127
    %151 = vmatprep.subr.bf16.mxu0 0
    %152 = vmatpush1.bf16.msra.mxu0 %v128
    %153 = vmatprep.subr.bf16.mxu0 0
    %154 = vmatpush1.bf16.msra.mxu0 0
    %155 = vmatprep.subr.bf16.mxu0 0
    %156 = vmatpush1.bf16.msra.mxu0 0
    %157 = vmatprep.subr.bf16.mxu0 0
    %158 = vmatpush1.bf16.msra.mxu0 0
    %159 = vmatprep.subr.bf16.mxu0 0
    %160 = vmatpush1.bf16.msra.mxu0 0
    %161 = vmatprep.subr.bf16.mxu0 0
    %162 = vmatpush1.bf16.msra.mxu0 0
    %163 = vmatprep.subr.bf16.mxu0 0
    %164 = vmatpush1.bf16.msra.mxu0 0
    %165 = vmatprep.subr.bf16.mxu0 0
    %166 = vmatpush1.bf16.msra.mxu0 0
    %167 = vmatprep.subr.bf16.mxu0 0
    %168 = vmatpush1.bf16.msra.mxu0 0
    %169 = vmatprep.mubr.bf16.mxu0 0
    %170 = vmatmul.mubr.bf16.gmra.mrb[0].mxu0 %v65
    %v171 = vpop.f32.mrb[0].mxu0
    %v172 = vadd.f32 %v87, %v171
    %v173 = vpop.f32.mrb[0].mxu0
    %v174 = vpop.f32.mrb[0].mxu0
    %v175 = vadd.f32 %v87, %v174
    %v176 = vpop.f32.mrb[0].mxu0
    %177 = vdwg.mxu0
    %v178 = vmax.f32 %v172, 0.0
    %v179 = vmax.f32 %v175, 0.0
    %v180 = vpack.c.bf16 %v179, %v178
    %v181 = vld [vmem:[#allocation7] sm:$0xf]
    %v182 = vld [vmem:[#allocation7 + $0x4] sm:$0xf]
    %v183 = vld [vmem:[#allocation7 + $0x8] sm:$0xf]
    %v184 = vld [vmem:[#allocation7 + $0xc] sm:$0xf]
    %v185 = vld [vmem:[#allocation7 + $0x10] sm:$0xf]
    %v186 = vld [vmem:[#allocation7 + $0x14] sm:$0xf]
    %v187 = vld [vmem:[#allocation7 + $0x18] sm:$0xf]
    %v188 = vld [vmem:[#allocation7 + $0x1c] sm:$0xf]
    %v189 = vld [vmem:[#allocation7 + $0x20] sm:$0xf]
    %v190 = vld [vmem:[#allocation7 + $0x24] sm:$0xf]
    %v191 = vld [vmem:[#allocation7 + $0x28] sm:$0xf]
    %v192 = vld [vmem:[#allocation7 + $0x2c] sm:$0xf]
    %v193 = vld [vmem:[#allocation7 + $0x30] sm:$0xf]
    %v194 = vld [vmem:[#allocation7 + $0x34] sm:$0xf]
    %v195 = vld [vmem:[#allocation7 + $0x38] sm:$0xf]
    %v196 = vld [vmem:[#allocation7 + $0x3c] sm:$0xf]
    %v197 = vld [vmem:[%s4] sm:$0x1]
    %v199 = vlaneseq
    %v200 = vshrl.u32 %v199, 7
    %v201 = vsub.s32 0, %v200
    %v202 = vrot.slane %v197, %v201
    %v220 = vunpack.c.l.b16 %v181
    %v221 = vunpack.c.l.b16 %v182
    %v222 = vunpack.c.l.b16 %v183
    %v223 = vunpack.c.l.b16 %v184
    %v224 = vunpack.c.l.b16 %v185
    %v225 = vunpack.c.l.b16 %v186
    %v226 = vunpack.c.l.b16 %v187
    %v227 = vunpack.c.l.b16 %v188
    %v228 = vunpack.c.l.b16 %v189
    %v229 = vunpack.c.l.b16 %v190
    %v230 = vunpack.c.l.b16 %v191
    %v231 = vunpack.c.l.b16 %v192
    %v232 = vunpack.c.l.b16 %v193
    %v233 = vunpack.c.l.b16 %v194
    %v234 = vunpack.c.l.b16 %v195
    %v235 = vunpack.c.l.b16 %v196
    %v236 = vpack.c.b16 %v221, %v220
    %v237 = vpack.c.b16 %v223, %v222
    %v238 = vpack.c.b16 %v225, %v224
    %v239 = vpack.c.b16 %v227, %v226
    %v240 = vpack.c.b16 %v229, %v228
    %v241 = vpack.c.b16 %v231, %v230
    %v242 = vpack.c.b16 %v233, %v232
    %v243 = vpack.c.b16 %v235, %v234
    %252 = vmatprep.subr.bf16.mxu0 0
    %253 = vmatpush1.bf16.msra.mxu0 %v236
    %254 = vmatprep.subr.bf16.mxu0 0
    %255 = vmatpush1.bf16.msra.mxu0 %v237
    %256 = vmatprep.subr.bf16.mxu0 0
    %257 = vmatpush1.bf16.msra.mxu0 %v238
    %258 = vmatprep.subr.bf16.mxu0 0
    %259 = vmatpush1.bf16.msra.mxu0 %v239
    %260 = vmatprep.subr.bf16.mxu0 0
    %261 = vmatpush1.bf16.msra.mxu0 %v240
    %262 = vmatprep.subr.bf16.mxu0 0
    %263 = vmatpush1.bf16.msra.mxu0 %v241
    %264 = vmatprep.subr.bf16.mxu0 0
    %265 = vmatpush1.bf16.msra.mxu0 %v242
    %266 = vmatprep.subr.bf16.mxu0 0
    %267 = vmatpush1.bf16.msra.mxu0 %v243
    %268 = vmatprep.subr.bf16.mxu0 0
    %269 = vmatpush1.bf16.msra.mxu0 0
    %270 = vmatprep.subr.bf16.mxu0 0
    %271 = vmatpush1.bf16.msra.mxu0 0
    %272 = vmatprep.subr.bf16.mxu0 0
    %273 = vmatpush1.bf16.msra.mxu0 0
    %274 = vmatprep.subr.bf16.mxu0 0
    %275 = vmatpush1.bf16.msra.mxu0 0
    %276 = vmatprep.subr.bf16.mxu0 0
    %277 = vmatpush1.bf16.msra.mxu0 0
    %278 = vmatprep.subr.bf16.mxu0 0
    %279 = vmatpush1.bf16.msra.mxu0 0
    %280 = vmatprep.subr.bf16.mxu0 0
    %281 = vmatpush1.bf16.msra.mxu0 0
    %282 = vmatprep.subr.bf16.mxu0 0
    %283 = vmatpush1.bf16.msra.mxu0 0
    %284 = vmatprep.mubr.bf16.mxu0 0
    %285 = vmatmul.mubr.bf16.gmra.mrb[0].mxu0 %v180
    %v286 = vpop.f32.mrb[0].mxu0
    %v287 = vadd.f32 %v202, %v286
    %v288 = vpop.f32.mrb[0].mxu0
    %v289 = vpop.f32.mrb[0].mxu0
    %v290 = vadd.f32 %v202, %v289
    %v291 = vpop.f32.mrb[0].mxu0
    %292 = vdwg.mxu0
    %293 = vst [vmem:[#allocation8] sm:$0xff] %v287
    %294 = vst [vmem:[#allocation8 + $0x8] sm:$0xff] %v290
    // Predicated region
    $region34: #{tpu_custom_call.1} parent=1 // pred_check
      _
    $region35: #{tpu_custom_call.1} parent=1 // pred_check_branch
      %296 = sbr.rel (0) target = $region37
    $region36: #{tpu_custom_call.1} parent=1 // pred_region
      %s298 = ssub.s32 256, 256
      %299 = vsyncadd [#allocation4], %s298
      %s300 = sshll.u32 [#allocation8], 4
      %s301 = int_to_ptr.vmem [resolvable:$true] %s300
      %306 = dma.vmem_to_hbm [thread:$0]  %s301, 256, %s5, [#allocation4], 128, 128, 8
    $region37: #{tpu_custom_call.1} parent=1 // pred_fallthru
      _
    // Predicated region
    $region38: #{tpu_custom_call.1} parent=1 // pred_check
      _
    $region39: #{tpu_custom_call.1} parent=1 // pred_check_branch
      %308 = sbr.rel (0) target = $region41
    $region40: #{tpu_custom_call.1} parent=1 // pred_region
      %309 = dma.done [#allocation4], 256
    $region41: #{tpu_custom_call.1} parent=1 // pred_fallthru
      _
    %310 = vsyncpa [#allocation3], 1
    %311 = vsyncpa [#allocation6], 1
    %312 = vsyncpa [#allocation4], 1

</llo_original>
